<compile_context>
chip_gen: v7x
topology: tpu7x:2x2x1
jax: 0.10.0
libtpu: 0.0.40
codegen_flags: <defaults>
</compile_context>

<pallas_src>
import jax
import jax.numpy as jnp
from jax.experimental import pallas as pl
from jax.experimental.pallas import tpu as pltpu


def _dropout_matmul_kernel(xf_ref, uf_ref, xb_ref, r_ref, x2f_ref, x3_ref):
    # --- dropout(p=0.5, training=True), lane-dense (rows, 128) layout -------
    xf = xf_ref[...]                               # (rows, 128) f32
    keep = uf_ref[...] >= jnp.float32(0.5)         # P(keep) = 1 - p = 0.5
    # scale kept elements by 1/(1-p) = 2, folded as x + x
    x2f_ref[...] = jnp.where(keep, xf + xf, jnp.float32(0.0)).astype(x2f_ref.dtype)

    # --- torch.matmul(x1, rand_like(x1)): batched (B*C) matmul on the MXU ---
    x3 = jnp.einsum(
        "bij,bjk->bik",
        xb_ref[...],                               # (BT, H, W) pre-dropout x1
        r_ref[...],                                # (BT, H, W) uniform [0,1)
        preferred_element_type=jnp.float32,
    )
    x3_ref[...] = x3.astype(x3_ref.dtype)


def model_forward(x, key):
    """x: (B, C, H, W) float32. Returns (x2, x3) matching the PyTorch body."""
    B, C, H, W = x.shape
    BT = B * C
    total = B * C * H * W

    # Lane-dense view for the dropout path (last dim = 128 lanes).
    if total % 128 == 0:
        lanes = 128
    else:                                          # fallback for odd shapes
        lanes = W
    rows = total // lanes
    xf = x.reshape(rows, lanes)
    xb = x.reshape(BT, H, W)

    # Wrapper-side randomness (see header note).
    k_drop, k_rand = jax.random.split(key)
    u = jax.random.uniform(k_drop, (rows, lanes), dtype=jnp.float32)
    r = jax.random.uniform(k_rand, (BT, H, W), dtype=jnp.float32)

    x2f, x3b = pl.pallas_call(
        _dropout_matmul_kernel,
        grid=(1,),                                 # single step: whole problem in VMEM
        out_shape=(
            jax.ShapeDtypeStruct((rows, lanes), x.dtype),   # x2 (dropout, lane-dense)
            jax.ShapeDtypeStruct((BT, H, W), x.dtype),      # x3 (matmul)
        ),
        in_specs=[
            pl.BlockSpec((rows, lanes), lambda i: (0, 0)),      # x, lane-dense view
            pl.BlockSpec((rows, lanes), lambda i: (0, 0)),      # dropout uniforms
            pl.BlockSpec((BT, H, W), lambda i: (0, 0, 0)),      # x, batched-matmul view
            pl.BlockSpec((BT, H, W), lambda i: (0, 0, 0)),      # rand_like operand
        ],
        out_specs=(
            pl.BlockSpec((rows, lanes), lambda i: (0, 0)),
            pl.BlockSpec((BT, H, W), lambda i: (0, 0, 0)),
        ),
        compiler_params=pltpu.CompilerParams(
            dimension_semantics=("parallel",),
        ),
    )(xf, u, xb, r)

    return x2f.reshape(x.shape), x3b.reshape(x.shape)


if __name__ == "__main__":
    key = jax.random.PRNGKey(0)
    k_x, k_model = jax.random.split(key)

    # Small shape consistent with the module (4-D tensor, square trailing dims
    # so matmul(x, rand_like(x)) is well-defined).
    x = jax.random.normal(k_x, (2, 4, 16, 16), dtype=jnp.float32)

    x2, x3 = model_forward(x, k_model)
    jax.block_until_ready((x2, x3))

    # Light sanity checks on semantics.
    assert x2.shape == x.shape and x3.shape == x.shape
    # dropout output elements are either 0 or 2*x
    nz = x2 != 0.0
    assert bool(jnp.all(jnp.where(nz, jnp.abs(x2 - 2.0 * x) < 1e-5, True)))
    # matmul output is finite
    assert bool(jnp.all(jnp.isfinite(x3)))

    print("KERNEL_OK")
</pallas_src>

<mosaic_0001>
module attributes {stable_mosaic.version = 11 : i64} {
  func.func @_dropout_matmul_kernel(%arg0: i32, %arg1: memref<16x128xf32, #tpu.memory_space<vmem>>, %arg2: memref<16x128xf32, #tpu.memory_space<vmem>>, %arg3: memref<8x16x16xf32, #tpu.memory_space<vmem>>, %arg4: memref<8x16x16xf32, #tpu.memory_space<vmem>>, %arg5: memref<16x128xf32, #tpu.memory_space<vmem>>, %arg6: memref<8x16x16xf32, #tpu.memory_space<vmem>>) attributes {dimension_semantics = [#tpu.dimension_semantics<parallel>], iteration_bounds = array<i64: 1>, scalar_prefetch = 0 : i64, scratch_operands = 0 : i64, tpu.core_type = #tpu.core_type<tc>, window_params = [{pipeline_mode = #tpu.pipeline_mode<synchronous>, transform_indices = @transform_0, window_bounds = array<i64: 16, 128>}, {pipeline_mode = #tpu.pipeline_mode<synchronous>, transform_indices = @transform_1, window_bounds = array<i64: 16, 128>}, {pipeline_mode = #tpu.pipeline_mode<synchronous>, transform_indices = @transform_2, window_bounds = array<i64: 8, 16, 16>}, {pipeline_mode = #tpu.pipeline_mode<synchronous>, transform_indices = @transform_3, window_bounds = array<i64: 8, 16, 16>}, {pipeline_mode = #tpu.pipeline_mode<synchronous>, transform_indices = @transform_4, window_bounds = array<i64: 16, 128>}, {pipeline_mode = #tpu.pipeline_mode<synchronous>, transform_indices = @transform_5, window_bounds = array<i64: 8, 16, 16>}]} {
    %c0 = arith.constant 0 : index
    %c0_0 = arith.constant 0 : index
    %0 = vector.load %arg1[%c0, %c0_0] : memref<16x128xf32, #tpu.memory_space<vmem>>, vector<16x128xf32>
    %c0_1 = arith.constant 0 : index
    %c0_2 = arith.constant 0 : index
    %1 = vector.load %arg2[%c0_1, %c0_2] : memref<16x128xf32, #tpu.memory_space<vmem>>, vector<16x128xf32>
    %cst = arith.constant 5.000000e-01 : f32
    %2 = vector.broadcast %cst : f32 to vector<16x128xf32>
    %3 = arith.cmpf oge, %1, %2 : vector<16x128xf32>
    %4 = arith.addf %0, %0 : vector<16x128xf32>
    %cst_3 = arith.constant 0.000000e+00 : f32
    %5 = vector.broadcast %cst_3 : f32 to vector<16x128xf32>
    %6 = arith.select %3, %4, %5 : vector<16x128xi1>, vector<16x128xf32>
    %c0_4 = arith.constant 0 : index
    %c0_5 = arith.constant 0 : index
    %7 = vector.load %arg5[%c0_4, %c0_5] : memref<16x128xf32, #tpu.memory_space<vmem>>, vector<16x128xf32>
    tpu.vector_store %arg5[%c0_4, %c0_5], %6 {strides = array<i32>} : memref<16x128xf32, #tpu.memory_space<vmem>>, vector<16x128xf32>,
    %c0_6 = arith.constant 0 : index
    %c0_7 = arith.constant 0 : index
    %c0_8 = arith.constant 0 : index
    %8 = vector.load %arg3[%c0_6, %c0_7, %c0_8] : memref<8x16x16xf32, #tpu.memory_space<vmem>>, vector<8x16x16xf32>
    %c0_9 = arith.constant 0 : index
    %c0_10 = arith.constant 0 : index
    %c0_11 = arith.constant 0 : index
    %9 = vector.load %arg4[%c0_9, %c0_10, %c0_11] : memref<8x16x16xf32, #tpu.memory_space<vmem>>, vector<8x16x16xf32>
    "tpu.trace_start"() <{level = 10 : i32, message = "bij,bjk->bik"}> : () -> ()
    %cst_12 = arith.constant dense<0.000000e+00> : vector<8x16x16xf32>
    %10 = tpu.matmul %8, %9, %cst_12 {dimension_numbers = #tpu.dot_dimension_numbers<[2], [1], [1], [2], [0, 0, 0, 1, 1, 2], [0], [0]>} : vector<8x16x16xf32>, vector<8x16x16xf32>, vector<8x16x16xf32> -> vector<8x16x16xf32>
    "tpu.trace_stop"() : () -> ()
    %c0_13 = arith.constant 0 : index
    %c0_14 = arith.constant 0 : index
    %c0_15 = arith.constant 0 : index
    %11 = vector.load %arg6[%c0_13, %c0_14, %c0_15] : memref<8x16x16xf32, #tpu.memory_space<vmem>>, vector<8x16x16xf32>
    tpu.vector_store %arg6[%c0_13, %c0_14, %c0_15], %10 {strides = array<i32>} : memref<8x16x16xf32, #tpu.memory_space<vmem>>, vector<8x16x16xf32>,
    return
  }
  func.func @transform_0(%arg0: i32) -> (i32, i32) {
    %c0_i32 = arith.constant 0 : i32
    %c0_i32_0 = arith.constant 0 : i32
    %c0_i32_1 = arith.constant 0 : i32
    return %c0_i32, %c0_i32_0 : i32, i32
  }
  func.func @transform_1(%arg0: i32) -> (i32, i32) {
    %c0_i32 = arith.constant 0 : i32
    %c0_i32_0 = arith.constant 0 : i32
    %c0_i32_1 = arith.constant 0 : i32
    return %c0_i32, %c0_i32_0 : i32, i32
  }
  func.func @transform_2(%arg0: i32) -> (i32, i32, i32) {
    %c0_i32 = arith.constant 0 : i32
    %c0_i32_0 = arith.constant 0 : i32
    %c0_i32_1 = arith.constant 0 : i32
    %c0_i32_2 = arith.constant 0 : i32
    return %c0_i32, %c0_i32_0, %c0_i32_1 : i32, i32, i32
  }
  func.func @transform_3(%arg0: i32) -> (i32, i32, i32) {
    %c0_i32 = arith.constant 0 : i32
    %c0_i32_0 = arith.constant 0 : i32
    %c0_i32_1 = arith.constant 0 : i32
    %c0_i32_2 = arith.constant 0 : i32
    return %c0_i32, %c0_i32_0, %c0_i32_1 : i32, i32, i32
  }
  func.func @transform_4(%arg0: i32) -> (i32, i32) {
    %c0_i32 = arith.constant 0 : i32
    %c0_i32_0 = arith.constant 0 : i32
    %c0_i32_1 = arith.constant 0 : i32
    return %c0_i32, %c0_i32_0 : i32, i32
  }
  func.func @transform_5(%arg0: i32) -> (i32, i32, i32) {
    %c0_i32 = arith.constant 0 : i32
    %c0_i32_0 = arith.constant 0 : i32
    %c0_i32_1 = arith.constant 0 : i32
    %c0_i32_2 = arith.constant 0 : i32
    return %c0_i32, %c0_i32_0, %c0_i32_1 : i32, i32, i32
  }
}

</mosaic_0001>

<llo_original>
// kernel: tpu_custom_call.1
$region0: #{tpu_custom_call.1}
  #allocation0 [shape = 'u32[]', space=smem, size = 0x4, offset = 0x4, fixed_abs, tag = 'smem constant byte address 0x4 - core index']
  #allocation1 [shape = 'u32[144,128]{1,0:T(1,128)}', space=vmem, size = 0x12000, scoped, tag = 'internal scratch']
  %s0 = inlined_call_operand.hbm [shape: f32[16,128], index: 0, kind: input, shape index: {}]
  %s1 = inlined_call_operand.hbm [shape: f32[16,128], index: 1, kind: input, shape index: {}]
  %s2 = inlined_call_operand.hbm [shape: f32[8,16,16], index: 2, kind: input, shape index: {}]
  %s3 = inlined_call_operand.hbm [shape: f32[8,16,16], index: 3, kind: input, shape index: {}]
  %s4 = inlined_call_operand.hbm [shape: f32[16,128], index: 4, kind: output, shape index: {0}]
  %s5 = inlined_call_operand.hbm [shape: f32[8,16,16], index: 5, kind: output, shape index: {1}]
  %6 = xla_tuple %s4, %s5
  %s7 = sld [smem:[#allocation0]]
  $region50: #{tpu_custom_call.1} parent=0
    _
  %s9 = ssub.s32 1, %s7
  %s10 = scalar_select 0, %s9, %s7
  $region1: #{tpu_custom_call.1} parent=0
    #allocation2 [shape = 'u8[8192]{0}', space=vmem, size = 0x2000, scoped, tag = 'input window, operand 0, single buffered']
    #allocation3 [shape = 's32[1]{0}', space=sflag, size = 0x4, scoped, tag = 'scoped memory for tpu_custom_call.1']
    #allocation4 [shape = 's32[1]{0}', space=sflag, size = 0x4, scoped, tag = 'scoped memory for tpu_custom_call.1']
    #allocation5 [shape = 'u8[8192]{0}', space=vmem, size = 0x2000, scoped, tag = 'input window, operand 1, single buffered']
    #allocation6 [shape = 's32[1]{0}', space=sflag, size = 0x4, scoped, tag = 'scoped memory for tpu_custom_call.1']
    #allocation7 [shape = 'u8[65536]{0}', space=vmem, size = 0x10000, scoped, tag = 'input window, operand 2, single buffered']
    #allocation8 [shape = 'u8[65536]{0}', space=vmem, size = 0x10000, scoped, tag = 'input window, operand 3, single buffered']
    #allocation9 [shape = 's32[1]{0}', space=sflag, size = 0x4, scoped, tag = 'scoped memory for tpu_custom_call.1']
    #allocation10 [shape = 'u8[8192]{0}', space=vmem, size = 0x2000, scoped, tag = 'output window, operand 0, single buffered']
    #allocation11 [shape = 'u8[65536]{0}', space=vmem, size = 0x10000, scoped, tag = 'output window, operand 1, single buffered']
    #allocation12 [shape = 's32[1]{0}', space=sflag, size = 0x4, scoped, tag = 'scoped memory for tpu_custom_call.1']
    %11 = vsyncpa [#allocation3], 0
    %12 = vsyncpa [#allocation6], 0
    %13 = vsyncpa [#allocation9], 0
    %14 = vsyncpa [#allocation4], 0
    %15 = vsyncpa [#allocation12], 0
    // Predicated region
    $region2: #{tpu_custom_call.1} parent=1 // pred_check
      _
    $region3: #{tpu_custom_call.1} parent=1 // pred_check_branch
      %17 = sbr.rel (0) target = $region5
    $region4: #{tpu_custom_call.1} parent=1 // pred_region
      %s19 = ssub.s32 256, 256
      %20 = vsyncadd [#allocation3], %s19
      %s21 = sshll.u32 [#allocation2], 4
      %s22 = int_to_ptr.vmem [resolvable:$true] %s21
      %27 = dma.hbm_to_vmem [thread:$0]  %s0, 256, %s22, [#allocation3], 128, 128, 8
    $region5: #{tpu_custom_call.1} parent=1 // pred_fallthru
      _
    // Predicated region
    $region6: #{tpu_custom_call.1} parent=1 // pred_check
      _
    $region7: #{tpu_custom_call.1} parent=1 // pred_check_branch
      %29 = sbr.rel (0) target = $region9
    $region8: #{tpu_custom_call.1} parent=1 // pred_region
      %s31 = ssub.s32 256, 256
      %32 = vsyncadd [#allocation6], %s31
      %s33 = sshll.u32 [#allocation5], 4
      %s34 = int_to_ptr.vmem [resolvable:$true] %s33
      %39 = dma.hbm_to_vmem [thread:$0]  %s1, 256, %s34, [#allocation6], 128, 128, 8
    $region9: #{tpu_custom_call.1} parent=1 // pred_fallthru
      _
    // Predicated region
    $region10: #{tpu_custom_call.1} parent=1 // pred_check
      _
    $region11: #{tpu_custom_call.1} parent=1 // pred_check_branch
      %41 = sbr.rel (0) target = $region13
    $region12: #{tpu_custom_call.1} parent=1 // pred_region
      %s43 = ssub.s32 2048, 2048
      %44 = vsyncadd [#allocation6], %s43
      %s45 = sshll.u32 [#allocation7], 4
      %s46 = int_to_ptr.vmem [resolvable:$true] %s45
      %51 = dma.hbm_to_vmem [thread:$0]  %s2, 2048, %s46, [#allocation6], 128, 128, 8
    $region13: #{tpu_custom_call.1} parent=1 // pred_fallthru
      _
    // Predicated region
    $region14: #{tpu_custom_call.1} parent=1 // pred_check
      _
    $region15: #{tpu_custom_call.1} parent=1 // pred_check_branch
      %53 = sbr.rel (0) target = $region17
    $region16: #{tpu_custom_call.1} parent=1 // pred_region
      %s55 = ssub.s32 2048, 2048
      %56 = vsyncadd [#allocation9], %s55
      %s57 = sshll.u32 [#allocation8], 4
      %s58 = int_to_ptr.vmem [resolvable:$true] %s57
      %63 = dma.hbm_to_vmem [thread:$0]  %s3, 2048, %s58, [#allocation9], 128, 128, 8
    $region17: #{tpu_custom_call.1} parent=1 // pred_fallthru
      _
    // Predicated region
    $region18: #{tpu_custom_call.1} parent=1 // pred_check
      _
    $region19: #{tpu_custom_call.1} parent=1 // pred_check_branch
      %65 = sbr.rel (0) target = $region21
    $region20: #{tpu_custom_call.1} parent=1 // pred_region
      %66 = dma.done [#allocation3], 256
    $region21: #{tpu_custom_call.1} parent=1 // pred_fallthru
      _
    // Predicated region
    $region22: #{tpu_custom_call.1} parent=1 // pred_check
      _
    $region23: #{tpu_custom_call.1} parent=1 // pred_check_branch
      %68 = sbr.rel (0) target = $region25
    $region24: #{tpu_custom_call.1} parent=1 // pred_region
      %69 = dma.done [#allocation6], 256
    $region25: #{tpu_custom_call.1} parent=1 // pred_fallthru
      _
    // Predicated region
    $region26: #{tpu_custom_call.1} parent=1 // pred_check
      _
    $region27: #{tpu_custom_call.1} parent=1 // pred_check_branch
      %71 = sbr.rel (0) target = $region29
    $region28: #{tpu_custom_call.1} parent=1 // pred_region
      %72 = dma.done [#allocation6], 2048
    $region29: #{tpu_custom_call.1} parent=1 // pred_fallthru
      _
    // Predicated region
    $region30: #{tpu_custom_call.1} parent=1 // pred_check
      _
    $region31: #{tpu_custom_call.1} parent=1 // pred_check_branch
      %74 = sbr.rel (0) target = $region33
    $region32: #{tpu_custom_call.1} parent=1 // pred_region
      %75 = dma.done [#allocation9], 2048
    $region33: #{tpu_custom_call.1} parent=1 // pred_fallthru
      _
    %v76 = vld [vmem:[#allocation2] sm:$0xff]
    %v77 = vld [vmem:[#allocation2 + $0x8] sm:$0xff]
    %v78 = vld [vmem:[#allocation5] sm:$0xff]
    %v79 = vld [vmem:[#allocation5 + $0x8] sm:$0xff]
    %vm80 = vcmp.ge.f32.partialorder %v78, 0.5
    %vm81 = vcmp.ge.f32.partialorder %v79, 0.5
    %v82 = vadd.f32 %v76, %v76
    %v83 = vadd.f32 %v77, %v77
    %v84 = vsel %vm80, %v82, 0.0
    %v85 = vsel %vm81, %v83, 0.0
    %86 = vst [vmem:[#allocation10] sm:$0xff] %v84
    %87 = vst [vmem:[#allocation10 + $0x8] sm:$0xff] %v85
    %v88 = vld [vmem:[#allocation7] sm:$0xff]
    %v89 = vld [vmem:[#allocation7 + $0x8] sm:$0xff]
    %v90 = vld [vmem:[#allocation7 + $0x10] sm:$0xff]
    %v91 = vld [vmem:[#allocation7 + $0x18] sm:$0xff]
    %v92 = vld [vmem:[#allocation7 + $0x20] sm:$0xff]
    %v93 = vld [vmem:[#allocation7 + $0x28] sm:$0xff]
    %v94 = vld [vmem:[#allocation7 + $0x30] sm:$0xff]
    %v95 = vld [vmem:[#allocation7 + $0x38] sm:$0xff]
    %v96 = vld [vmem:[#allocation7 + $0x40] sm:$0xff]
    %v97 = vld [vmem:[#allocation7 + $0x48] sm:$0xff]
    %v98 = vld [vmem:[#allocation7 + $0x50] sm:$0xff]
    %v99 = vld [vmem:[#allocation7 + $0x58] sm:$0xff]
    %v100 = vld [vmem:[#allocation7 + $0x60] sm:$0xff]
    %v101 = vld [vmem:[#allocation7 + $0x68] sm:$0xff]
    %v102 = vld [vmem:[#allocation7 + $0x70] sm:$0xff]
    %v103 = vld [vmem:[#allocation7 + $0x78] sm:$0xff]
    %v104 = vld [vmem:[#allocation8] sm:$0xff]
    %v105 = vld [vmem:[#allocation8 + $0x8] sm:$0xff]
    %v106 = vld [vmem:[#allocation8 + $0x10] sm:$0xff]
    %v107 = vld [vmem:[#allocation8 + $0x18] sm:$0xff]
    %v108 = vld [vmem:[#allocation8 + $0x20] sm:$0xff]
    %v109 = vld [vmem:[#allocation8 + $0x28] sm:$0xff]
    %v110 = vld [vmem:[#allocation8 + $0x30] sm:$0xff]
    %v111 = vld [vmem:[#allocation8 + $0x38] sm:$0xff]
    %v112 = vld [vmem:[#allocation8 + $0x40] sm:$0xff]
    %v113 = vld [vmem:[#allocation8 + $0x48] sm:$0xff]
    %v114 = vld [vmem:[#allocation8 + $0x50] sm:$0xff]
    %v115 = vld [vmem:[#allocation8 + $0x58] sm:$0xff]
    %v116 = vld [vmem:[#allocation8 + $0x60] sm:$0xff]
    %v117 = vld [vmem:[#allocation8 + $0x68] sm:$0xff]
    %v118 = vld [vmem:[#allocation8 + $0x70] sm:$0xff]
    %v119 = vld [vmem:[#allocation8 + $0x78] sm:$0xff]
    %vm120 = vcmask 130048
    %v122 = vsel %vm120, %v88, 0
    %v125 = vsel %vm120, %v89, 0
    %127 = vmatprep.subr.mxu0 0.0
    %128 = vmatpush1.msra.mxu0 %v104
    %129 = vmatprep.subr.mxu0 0.0
    %130 = vmatpush1.msra.mxu0 %v105
    %131 = vmatprep.subr.mxu0 0.0
    %132 = vmatpush1.msra.mxu0 0.0
    %133 = vmatprep.subr.mxu0 0.0
    %134 = vmatpush1.msra.mxu0 0.0
    %135 = vmatprep.subr.mxu0 0.0
    %136 = vmatpush1.msra.mxu0 0.0
    %137 = vmatprep.subr.mxu0 0.0
    %138 = vmatpush1.msra.mxu0 0.0
    %139 = vmatprep.subr.mxu0 0.0
    %140 = vmatpush1.msra.mxu0 0.0
    %141 = vmatprep.subr.mxu0 0.0
    %142 = vmatpush1.msra.mxu0 0.0
    %143 = vmatprep.subr.mxu0 0.0
    %144 = vmatpush1.msra.mxu0 0.0
    %145 = vmatprep.subr.mxu0 0.0
    %146 = vmatpush1.msra.mxu0 0.0
    %147 = vmatprep.subr.mxu0 0.0
    %148 = vmatpush1.msra.mxu0 0.0
    %149 = vmatprep.subr.mxu0 0.0
    %150 = vmatpush1.msra.mxu0 0.0
    %151 = vmatprep.subr.mxu0 0.0
    %152 = vmatpush1.msra.mxu0 0.0
    %153 = vmatprep.subr.mxu0 0.0
    %154 = vmatpush1.msra.mxu0 0.0
    %155 = vmatprep.subr.mxu0 0.0
    %156 = vmatpush1.msra.mxu0 0.0
    %157 = vmatprep.subr.mxu0 0.0
    %158 = vmatpush1.msra.mxu0 0.0
    %159 = vmatprep.subr.mxu0 0.0
    %160 = vmatpush1.msra.mxu0 0.0
    %161 = vmatprep.subr.mxu0 0.0
    %162 = vmatpush1.msra.mxu0 0.0
    %163 = vmatprep.subr.mxu0 0.0
    %164 = vmatpush1.msra.mxu0 0.0
    %165 = vmatprep.subr.mxu0 0.0
    %166 = vmatpush1.msra.mxu0 0.0
    %167 = vmatprep.subr.mxu0 0.0
    %168 = vmatpush1.msra.mxu0 0.0
    %169 = vmatprep.subr.mxu0 0.0
    %170 = vmatpush1.msra.mxu0 0.0
    %171 = vmatprep.subr.mxu0 0.0
    %172 = vmatpush1.msra.mxu0 0.0
    %173 = vmatprep.subr.mxu0 0.0
    %174 = vmatpush1.msra.mxu0 0.0
    %175 = vmatprep.subr.mxu0 0.0
    %176 = vmatpush1.msra.mxu0 0.0
    %177 = vmatprep.subr.mxu0 0.0
    %178 = vmatpush1.msra.mxu0 0.0
    %179 = vmatprep.subr.mxu0 0.0
    %180 = vmatpush1.msra.mxu0 0.0
    %181 = vmatprep.subr.mxu0 0.0
    %182 = vmatpush1.msra.mxu0 0.0
    %183 = vmatprep.subr.mxu0 0.0
    %184 = vmatpush1.msra.mxu0 0.0
    %185 = vmatprep.subr.mxu0 0.0
    %186 = vmatpush1.msra.mxu0 0.0
    %187 = vmatprep.subr.mxu0 0.0
    %188 = vmatpush1.msra.mxu0 0.0
    %189 = vmatprep.subr.mxu0 0.0
    %190 = vmatpush1.msra.mxu0 0.0
    %191 = vmatprep.mubr.f32.mxu0 0.0
    %192 = vmatmul.mubr.f32.gmra.mrb[0].mxu0 %v122
    %v193 = vpop.f32.mrb[0].mxu0
    %v194 = vadd.f32 0.0, %v193
    %v195 = vpop.f32.mrb[0].mxu0
    %196 = vmatprep.mubr.f32.mxu0 0.0
    %197 = vmatmul.mubr.f32.gmra.mrb[0].mxu0 %v125
    %v198 = vpop.f32.mrb[0].mxu0
    %v199 = vadd.f32 0.0, %v198
    %v200 = vpop.f32.mrb[0].mxu0
    %201 = vdwg.mxu0
    %v203 = vsel %vm120, %v90, 0
    %v206 = vsel %vm120, %v91, 0
    %208 = vmatprep.subr.mxu0 0.0
    %209 = vmatpush1.msra.mxu0 %v106
    %210 = vmatprep.subr.mxu0 0.0
    %211 = vmatpush1.msra.mxu0 %v107
    %212 = vmatprep.subr.mxu0 0.0
    %213 = vmatpush1.msra.mxu0 0.0
    %214 = vmatprep.subr.mxu0 0.0
    %215 = vmatpush1.msra.mxu0 0.0
    %216 = vmatprep.subr.mxu0 0.0
    %217 = vmatpush1.msra.mxu0 0.0
    %218 = vmatprep.subr.mxu0 0.0
    %219 = vmatpush1.msra.mxu0 0.0
    %220 = vmatprep.subr.mxu0 0.0
    %221 = vmatpush1.msra.mxu0 0.0
    %222 = vmatprep.subr.mxu0 0.0
    %223 = vmatpush1.msra.mxu0 0.0
    %224 = vmatprep.subr.mxu0 0.0
    %225 = vmatpush1.msra.mxu0 0.0
    %226 = vmatprep.subr.mxu0 0.0
    %227 = vmatpush1.msra.mxu0 0.0
    %228 = vmatprep.subr.mxu0 0.0
    %229 = vmatpush1.msra.mxu0 0.0
    %230 = vmatprep.subr.mxu0 0.0
    %231 = vmatpush1.msra.mxu0 0.0
    %232 = vmatprep.subr.mxu0 0.0
    %233 = vmatpush1.msra.mxu0 0.0
    %234 = vmatprep.subr.mxu0 0.0
    %235 = vmatpush1.msra.mxu0 0.0
    %236 = vmatprep.subr.mxu0 0.0
    %237 = vmatpush1.msra.mxu0 0.0
    %238 = vmatprep.subr.mxu0 0.0
    %239 = vmatpush1.msra.mxu0 0.0
    %240 = vmatprep.subr.mxu0 0.0
    %241 = vmatpush1.msra.mxu0 0.0
    %242 = vmatprep.subr.mxu0 0.0
    %243 = vmatpush1.msra.mxu0 0.0
    %244 = vmatprep.subr.mxu0 0.0
    %245 = vmatpush1.msra.mxu0 0.0
    %246 = vmatprep.subr.mxu0 0.0
    %247 = vmatpush1.msra.mxu0 0.0
    %248 = vmatprep.subr.mxu0 0.0
    %249 = vmatpush1.msra.mxu0 0.0
    %250 = vmatprep.subr.mxu0 0.0
    %251 = vmatpush1.msra.mxu0 0.0
    %252 = vmatprep.subr.mxu0 0.0
    %253 = vmatpush1.msra.mxu0 0.0
    %254 = vmatprep.subr.mxu0 0.0
    %255 = vmatpush1.msra.mxu0 0.0
    %256 = vmatprep.subr.mxu0 0.0
    %257 = vmatpush1.msra.mxu0 0.0
    %258 = vmatprep.subr.mxu0 0.0
    %259 = vmatpush1.msra.mxu0 0.0
    %260 = vmatprep.subr.mxu0 0.0
    %261 = vmatpush1.msra.mxu0 0.0
    %262 = vmatprep.subr.mxu0 0.0
    %263 = vmatpush1.msra.mxu0 0.0
    %264 = vmatprep.subr.mxu0 0.0
    %265 = vmatpush1.msra.mxu0 0.0
    %266 = vmatprep.subr.mxu0 0.0
    %267 = vmatpush1.msra.mxu0 0.0
    %268 = vmatprep.subr.mxu0 0.0
    %269 = vmatpush1.msra.mxu0 0.0
    %270 = vmatprep.subr.mxu0 0.0
    %271 = vmatpush1.msra.mxu0 0.0
    %272 = vmatprep.mubr.f32.mxu0 0.0
    %273 = vmatmul.mubr.f32.gmra.mrb[0].mxu0 %v203
    %v274 = vpop.f32.mrb[0].mxu0
    %v275 = vadd.f32 0.0, %v274
    %v276 = vpop.f32.mrb[0].mxu0
    %277 = vmatprep.mubr.f32.mxu0 0.0
    %278 = vmatmul.mubr.f32.gmra.mrb[0].mxu0 %v206
    %v279 = vpop.f32.mrb[0].mxu0
    %v280 = vadd.f32 0.0, %v279
    %v281 = vpop.f32.mrb[0].mxu0
    %282 = vdwg.mxu0
    %v284 = vsel %vm120, %v92, 0
    %v287 = vsel %vm120, %v93, 0
    %289 = vmatprep.subr.mxu0 0.0
    %290 = vmatpush1.msra.mxu0 %v108
    %291 = vmatprep.subr.mxu0 0.0
    %292 = vmatpush1.msra.mxu0 %v109
    %293 = vmatprep.subr.mxu0 0.0
    %294 = vmatpush1.msra.mxu0 0.0
    %295 = vmatprep.subr.mxu0 0.0
    %296 = vmatpush1.msra.mxu0 0.0
    %297 = vmatprep.subr.mxu0 0.0
    %298 = vmatpush1.msra.mxu0 0.0
    %299 = vmatprep.subr.mxu0 0.0
    %300 = vmatpush1.msra.mxu0 0.0
    %301 = vmatprep.subr.mxu0 0.0
    %302 = vmatpush1.msra.mxu0 0.0
    %303 = vmatprep.subr.mxu0 0.0
    %304 = vmatpush1.msra.mxu0 0.0
    %305 = vmatprep.subr.mxu0 0.0
    %306 = vmatpush1.msra.mxu0 0.0
    %307 = vmatprep.subr.mxu0 0.0
    %308 = vmatpush1.msra.mxu0 0.0
    %309 = vmatprep.subr.mxu0 0.0
    %310 = vmatpush1.msra.mxu0 0.0
    %311 = vmatprep.subr.mxu0 0.0
    %312 = vmatpush1.msra.mxu0 0.0
    %313 = vmatprep.subr.mxu0 0.0
    %314 = vmatpush1.msra.mxu0 0.0
    %315 = vmatprep.subr.mxu0 0.0
    %316 = vmatpush1.msra.mxu0 0.0
    %317 = vmatprep.subr.mxu0 0.0
    %318 = vmatpush1.msra.mxu0 0.0
    %319 = vmatprep.subr.mxu0 0.0
    %320 = vmatpush1.msra.mxu0 0.0
    %321 = vmatprep.subr.mxu0 0.0
    %322 = vmatpush1.msra.mxu0 0.0
    %323 = vmatprep.subr.mxu0 0.0
    %324 = vmatpush1.msra.mxu0 0.0
    %325 = vmatprep.subr.mxu0 0.0
    %326 = vmatpush1.msra.mxu0 0.0
    %327 = vmatprep.subr.mxu0 0.0
    %328 = vmatpush1.msra.mxu0 0.0
    %329 = vmatprep.subr.mxu0 0.0
    %330 = vmatpush1.msra.mxu0 0.0
    %331 = vmatprep.subr.mxu0 0.0
    %332 = vmatpush1.msra.mxu0 0.0
    %333 = vmatprep.subr.mxu0 0.0
    %334 = vmatpush1.msra.mxu0 0.0
    %335 = vmatprep.subr.mxu0 0.0
    %336 = vmatpush1.msra.mxu0 0.0
    %337 = vmatprep.subr.mxu0 0.0
    %338 = vmatpush1.msra.mxu0 0.0
    %339 = vmatprep.subr.mxu0 0.0
    %340 = vmatpush1.msra.mxu0 0.0
    %341 = vmatprep.subr.mxu0 0.0
    %342 = vmatpush1.msra.mxu0 0.0
    %343 = vmatprep.subr.mxu0 0.0
    %344 = vmatpush1.msra.mxu0 0.0
    %345 = vmatprep.subr.mxu0 0.0
    %346 = vmatpush1.msra.mxu0 0.0
    %347 = vmatprep.subr.mxu0 0.0
    %348 = vmatpush1.msra.mxu0 0.0
    %349 = vmatprep.subr.mxu0 0.0
    %350 = vmatpush1.msra.mxu0 0.0
    %351 = vmatprep.subr.mxu0 0.0
    %352 = vmatpush1.msra.mxu0 0.0
    %353 = vmatprep.mubr.f32.mxu0 0.0
    %354 = vmatmul.mubr.f32.gmra.mrb[0].mxu0 %v284
    %v355 = vpop.f32.mrb[0].mxu0
    %v356 = vadd.f32 0.0, %v355
    %v357 = vpop.f32.mrb[0].mxu0
    %358 = vmatprep.mubr.f32.mxu0 0.0
    %359 = vmatmul.mubr.f32.gmra.mrb[0].mxu0 %v287
    %v360 = vpop.f32.mrb[0].mxu0
    %v361 = vadd.f32 0.0, %v360
    %v362 = vpop.f32.mrb[0].mxu0
    %363 = vdwg.mxu0
    %v365 = vsel %vm120, %v94, 0
    %v368 = vsel %vm120, %v95, 0
    %370 = vmatprep.subr.mxu0 0.0
    %371 = vmatpush1.msra.mxu0 %v110
    %372 = vmatprep.subr.mxu0 0.0
    %373 = vmatpush1.msra.mxu0 %v111
    %374 = vmatprep.subr.mxu0 0.0
    %375 = vmatpush1.msra.mxu0 0.0
    %376 = vmatprep.subr.mxu0 0.0
    %377 = vmatpush1.msra.mxu0 0.0
    %378 = vmatprep.subr.mxu0 0.0
    %379 = vmatpush1.msra.mxu0 0.0
    %380 = vmatprep.subr.mxu0 0.0
    %381 = vmatpush1.msra.mxu0 0.0
    %382 = vmatprep.subr.mxu0 0.0
    %383 = vmatpush1.msra.mxu0 0.0
    %384 = vmatprep.subr.mxu0 0.0
    %385 = vmatpush1.msra.mxu0 0.0
    %386 = vmatprep.subr.mxu0 0.0
    %387 = vmatpush1.msra.mxu0 0.0
    %388 = vmatprep.subr.mxu0 0.0
    %389 = vmatpush1.msra.mxu0 0.0
    %390 = vmatprep.subr.mxu0 0.0
    %391 = vmatpush1.msra.mxu0 0.0
    %392 = vmatprep.subr.mxu0 0.0
    %393 = vmatpush1.msra.mxu0 0.0
    %394 = vmatprep.subr.mxu0 0.0
    %395 = vmatpush1.msra.mxu0 0.0
    %396 = vmatprep.subr.mxu0 0.0
    %397 = vmatpush1.msra.mxu0 0.0
    %398 = vmatprep.subr.mxu0 0.0
    %399 = vmatpush1.msra.mxu0 0.0
    %400 = vmatprep.subr.mxu0 0.0
    %401 = vmatpush1.msra.mxu0 0.0
    %402 = vmatprep.subr.mxu0 0.0
    %403 = vmatpush1.msra.mxu0 0.0
    %404 = vmatprep.subr.mxu0 0.0
    %405 = vmatpush1.msra.mxu0 0.0
    %406 = vmatprep.subr.mxu0 0.0
    %407 = vmatpush1.msra.mxu0 0.0
    %408 = vmatprep.subr.mxu0 0.0
    %409 = vmatpush1.msra.mxu0 0.0
    %410 = vmatprep.subr.mxu0 0.0
    %411 = vmatpush1.msra.mxu0 0.0
    %412 = vmatprep.subr.mxu0 0.0
    %413 = vmatpush1.msra.mxu0 0.0
    %414 = vmatprep.subr.mxu0 0.0
    %415 = vmatpush1.msra.mxu0 0.0
    %416 = vmatprep.subr.mxu0 0.0
    %417 = vmatpush1.msra.mxu0 0.0
    %418 = vmatprep.subr.mxu0 0.0
    %419 = vmatpush1.msra.mxu0 0.0
    %420 = vmatprep.subr.mxu0 0.0
    %421 = vmatpush1.msra.mxu0 0.0
    %422 = vmatprep.subr.mxu0 0.0
    %423 = vmatpush1.msra.mxu0 0.0
    %424 = vmatprep.subr.mxu0 0.0
    %425 = vmatpush1.msra.mxu0 0.0
    %426 = vmatprep.subr.mxu0 0.0
    %427 = vmatpush1.msra.mxu0 0.0
    %428 = vmatprep.subr.mxu0 0.0
    %429 = vmatpush1.msra.mxu0 0.0
    %430 = vmatprep.subr.mxu0 0.0
    %431 = vmatpush1.msra.mxu0 0.0
    %432 = vmatprep.subr.mxu0 0.0
    %433 = vmatpush1.msra.mxu0 0.0
    %434 = vmatprep.mubr.f32.mxu0 0.0
    %435 = vmatmul.mubr.f32.gmra.mrb[0].mxu0 %v365
    %v436 = vpop.f32.mrb[0].mxu0
    %v437 = vadd.f32 0.0, %v436
    %v438 = vpop.f32.mrb[0].mxu0
    %439 = vmatprep.mubr.f32.mxu0 0.0
    %440 = vmatmul.mubr.f32.gmra.mrb[0].mxu0 %v368
    %v441 = vpop.f32.mrb[0].mxu0
    %v442 = vadd.f32 0.0, %v441
    %v443 = vpop.f32.mrb[0].mxu0
    %444 = vdwg.mxu0
    %v446 = vsel %vm120, %v96, 0
    %v449 = vsel %vm120, %v97, 0
    %451 = vmatprep.subr.mxu0 0.0
    %452 = vmatpush1.msra.mxu0 %v112
    %453 = vmatprep.subr.mxu0 0.0
    %454 = vmatpush1.msra.mxu0 %v113
    %455 = vmatprep.subr.mxu0 0.0
    %456 = vmatpush1.msra.mxu0 0.0
    %457 = vmatprep.subr.mxu0 0.0
    %458 = vmatpush1.msra.mxu0 0.0
    %459 = vmatprep.subr.mxu0 0.0
    %460 = vmatpush1.msra.mxu0 0.0
    %461 = vmatprep.subr.mxu0 0.0
    %462 = vmatpush1.msra.mxu0 0.0
    %463 = vmatprep.subr.mxu0 0.0
    %464 = vmatpush1.msra.mxu0 0.0
    %465 = vmatprep.subr.mxu0 0.0
    %466 = vmatpush1.msra.mxu0 0.0
    %467 = vmatprep.subr.mxu0 0.0
    %468 = vmatpush1.msra.mxu0 0.0
    %469 = vmatprep.subr.mxu0 0.0
    %470 = vmatpush1.msra.mxu0 0.0
    %471 = vmatprep.subr.mxu0 0.0
    %472 = vmatpush1.msra.mxu0 0.0
    %473 = vmatprep.subr.mxu0 0.0
    %474 = vmatpush1.msra.mxu0 0.0
    %475 = vmatprep.subr.mxu0 0.0
    %476 = vmatpush1.msra.mxu0 0.0
    %477 = vmatprep.subr.mxu0 0.0
    %478 = vmatpush1.msra.mxu0 0.0
    %479 = vmatprep.subr.mxu0 0.0
    %480 = vmatpush1.msra.mxu0 0.0
    %481 = vmatprep.subr.mxu0 0.0
    %482 = vmatpush1.msra.mxu0 0.0
    %483 = vmatprep.subr.mxu0 0.0
    %484 = vmatpush1.msra.mxu0 0.0
    %485 = vmatprep.subr.mxu0 0.0
    %486 = vmatpush1.msra.mxu0 0.0
    %487 = vmatprep.subr.mxu0 0.0
    %488 = vmatpush1.msra.mxu0 0.0
    %489 = vmatprep.subr.mxu0 0.0
    %490 = vmatpush1.msra.mxu0 0.0
    %491 = vmatprep.subr.mxu0 0.0
    %492 = vmatpush1.msra.mxu0 0.0
    %493 = vmatprep.subr.mxu0 0.0
    %494 = vmatpush1.msra.mxu0 0.0
    %495 = vmatprep.subr.mxu0 0.0
    %496 = vmatpush1.msra.mxu0 0.0
    %497 = vmatprep.subr.mxu0 0.0
    %498 = vmatpush1.msra.mxu0 0.0
    %499 = vmatprep.subr.mxu0 0.0
    %500 = vmatpush1.msra.mxu0 0.0
    %501 = vmatprep.subr.mxu0 0.0
    %502 = vmatpush1.msra.mxu0 0.0
    %503 = vmatprep.subr.mxu0 0.0
    %504 = vmatpush1.msra.mxu0 0.0
    %505 = vmatprep.subr.mxu0 0.0
    %506 = vmatpush1.msra.mxu0 0.0
    %507 = vmatprep.subr.mxu0 0.0
    %508 = vmatpush1.msra.mxu0 0.0
    %509 = vmatprep.subr.mxu0 0.0
    %510 = vmatpush1.msra.mxu0 0.0
    %511 = vmatprep.subr.mxu0 0.0
    %512 = vmatpush1.msra.mxu0 0.0
    %513 = vmatprep.subr.mxu0 0.0
    %514 = vmatpush1.msra.mxu0 0.0
    %515 = vmatprep.mubr.f32.mxu0 0.0
    %516 = vmatmul.mubr.f32.gmra.mrb[0].mxu0 %v446
    %v517 = vpop.f32.mrb[0].mxu0
    %v518 = vadd.f32 0.0, %v517
    %v519 = vpop.f32.mrb[0].mxu0
    %520 = vmatprep.mubr.f32.mxu0 0.0
    %521 = vmatmul.mubr.f32.gmra.mrb[0].mxu0 %v449
    %v522 = vpop.f32.mrb[0].mxu0
    %v523 = vadd.f32 0.0, %v522
    %v524 = vpop.f32.mrb[0].mxu0
    %525 = vdwg.mxu0
    %v527 = vsel %vm120, %v98, 0
    %v530 = vsel %vm120, %v99, 0
    %532 = vmatprep.subr.mxu0 0.0
    %533 = vmatpush1.msra.mxu0 %v114
    %534 = vmatprep.subr.mxu0 0.0
    %535 = vmatpush1.msra.mxu0 %v115
    %536 = vmatprep.subr.mxu0 0.0
    %537 = vmatpush1.msra.mxu0 0.0
    %538 = vmatprep.subr.mxu0 0.0
    %539 = vmatpush1.msra.mxu0 0.0
    %540 = vmatprep.subr.mxu0 0.0
    %541 = vmatpush1.msra.mxu0 0.0
    %542 = vmatprep.subr.mxu0 0.0
    %543 = vmatpush1.msra.mxu0 0.0
    %544 = vmatprep.subr.mxu0 0.0
    %545 = vmatpush1.msra.mxu0 0.0
    %546 = vmatprep.subr.mxu0 0.0
    %547 = vmatpush1.msra.mxu0 0.0
    %548 = vmatprep.subr.mxu0 0.0
    %549 = vmatpush1.msra.mxu0 0.0
    %550 = vmatprep.subr.mxu0 0.0
    %551 = vmatpush1.msra.mxu0 0.0
    %552 = vmatprep.subr.mxu0 0.0
    %553 = vmatpush1.msra.mxu0 0.0
    %554 = vmatprep.subr.mxu0 0.0
    %555 = vmatpush1.msra.mxu0 0.0
    %556 = vmatprep.subr.mxu0 0.0
    %557 = vmatpush1.msra.mxu0 0.0
    %558 = vmatprep.subr.mxu0 0.0
    %559 = vmatpush1.msra.mxu0 0.0
    %560 = vmatprep.subr.mxu0 0.0
    %561 = vmatpush1.msra.mxu0 0.0
    %562 = vmatprep.subr.mxu0 0.0
    %563 = vmatpush1.msra.mxu0 0.0
    %564 = vmatprep.subr.mxu0 0.0
    %565 = vmatpush1.msra.mxu0 0.0
    %566 = vmatprep.subr.mxu0 0.0
    %567 = vmatpush1.msra.mxu0 0.0
    %568 = vmatprep.subr.mxu0 0.0
    %569 = vmatpush1.msra.mxu0 0.0
    %570 = vmatprep.subr.mxu0 0.0
    %571 = vmatpush1.msra.mxu0 0.0
    %572 = vmatprep.subr.mxu0 0.0
    %573 = vmatpush1.msra.mxu0 0.0
    %574 = vmatprep.subr.mxu0 0.0
    %575 = vmatpush1.msra.mxu0 0.0
    %576 = vmatprep.subr.mxu0 0.0
    %577 = vmatpush1.msra.mxu0 0.0
    %578 = vmatprep.subr.mxu0 0.0
    %579 = vmatpush1.msra.mxu0 0.0
    %580 = vmatprep.subr.mxu0 0.0
    %581 = vmatpush1.msra.mxu0 0.0
    %582 = vmatprep.subr.mxu0 0.0
    %583 = vmatpush1.msra.mxu0 0.0
    %584 = vmatprep.subr.mxu0 0.0
    %585 = vmatpush1.msra.mxu0 0.0
    %586 = vmatprep.subr.mxu0 0.0
    %587 = vmatpush1.msra.mxu0 0.0
    %588 = vmatprep.subr.mxu0 0.0
    %589 = vmatpush1.msra.mxu0 0.0
    %590 = vmatprep.subr.mxu0 0.0
    %591 = vmatpush1.msra.mxu0 0.0
    %592 = vmatprep.subr.mxu0 0.0
    %593 = vmatpush1.msra.mxu0 0.0
    %594 = vmatprep.subr.mxu0 0.0
    %595 = vmatpush1.msra.mxu0 0.0
    %596 = vmatprep.mubr.f32.mxu0 0.0
    %597 = vmatmul.mubr.f32.gmra.mrb[0].mxu0 %v527
    %v598 = vpop.f32.mrb[0].mxu0
    %v599 = vadd.f32 0.0, %v598
    %v600 = vpop.f32.mrb[0].mxu0
    %601 = vmatprep.mubr.f32.mxu0 0.0
    %602 = vmatmul.mubr.f32.gmra.mrb[0].mxu0 %v530
    %v603 = vpop.f32.mrb[0].mxu0
    %v604 = vadd.f32 0.0, %v603
    %v605 = vpop.f32.mrb[0].mxu0
    %606 = vdwg.mxu0
    %v608 = vsel %vm120, %v100, 0
    %v611 = vsel %vm120, %v101, 0
    %613 = vmatprep.subr.mxu0 0.0
    %614 = vmatpush1.msra.mxu0 %v116
    %615 = vmatprep.subr.mxu0 0.0
    %616 = vmatpush1.msra.mxu0 %v117
    %617 = vmatprep.subr.mxu0 0.0
    %618 = vmatpush1.msra.mxu0 0.0
    %619 = vmatprep.subr.mxu0 0.0
    %620 = vmatpush1.msra.mxu0 0.0
    %621 = vmatprep.subr.mxu0 0.0
    %622 = vmatpush1.msra.mxu0 0.0
    %623 = vmatprep.subr.mxu0 0.0
    %624 = vmatpush1.msra.mxu0 0.0
    %625 = vmatprep.subr.mxu0 0.0
    %626 = vmatpush1.msra.mxu0 0.0
    %627 = vmatprep.subr.mxu0 0.0
    %628 = vmatpush1.msra.mxu0 0.0
    %629 = vmatprep.subr.mxu0 0.0
    %630 = vmatpush1.msra.mxu0 0.0
    %631 = vmatprep.subr.mxu0 0.0
    %632 = vmatpush1.msra.mxu0 0.0
    %633 = vmatprep.subr.mxu0 0.0
    %634 = vmatpush1.msra.mxu0 0.0
    %635 = vmatprep.subr.mxu0 0.0
    %636 = vmatpush1.msra.mxu0 0.0
    %637 = vmatprep.subr.mxu0 0.0
    %638 = vmatpush1.msra.mxu0 0.0
    %639 = vmatprep.subr.mxu0 0.0
    %640 = vmatpush1.msra.mxu0 0.0
    %641 = vmatprep.subr.mxu0 0.0
    %642 = vmatpush1.msra.mxu0 0.0
    %643 = vmatprep.subr.mxu0 0.0
    %644 = vmatpush1.msra.mxu0 0.0
    %645 = vmatprep.subr.mxu0 0.0
    %646 = vmatpush1.msra.mxu0 0.0
    %647 = vmatprep.subr.mxu0 0.0
    %648 = vmatpush1.msra.mxu0 0.0
    %649 = vmatprep.subr.mxu0 0.0
    %650 = vmatpush1.msra.mxu0 0.0
    %651 = vmatprep.subr.mxu0 0.0
    %652 = vmatpush1.msra.mxu0 0.0
    %653 = vmatprep.subr.mxu0 0.0
    %654 = vmatpush1.msra.mxu0 0.0
    %655 = vmatprep.subr.mxu0 0.0
    %656 = vmatpush1.msra.mxu0 0.0
    %657 = vmatprep.subr.mxu0 0.0
    %658 = vmatpush1.msra.mxu0 0.0
    %659 = vmatprep.subr.mxu0 0.0
    %660 = vmatpush1.msra.mxu0 0.0
    %661 = vmatprep.subr.mxu0 0.0
    %662 = vmatpush1.msra.mxu0 0.0
    %663 = vmatprep.subr.mxu0 0.0
    %664 = vmatpush1.msra.mxu0 0.0
    %665 = vmatprep.subr.mxu0 0.0
    %666 = vmatpush1.msra.mxu0 0.0
    %667 = vmatprep.subr.mxu0 0.0
    %668 = vmatpush1.msra.mxu0 0.0
    %669 = vmatprep.subr.mxu0 0.0
    %670 = vmatpush1.msra.mxu0 0.0
    %671 = vmatprep.subr.mxu0 0.0
    %672 = vmatpush1.msra.mxu0 0.0
    %673 = vmatprep.subr.mxu0 0.0
    %674 = vmatpush1.msra.mxu0 0.0
    %675 = vmatprep.subr.mxu0 0.0
    %676 = vmatpush1.msra.mxu0 0.0
    %677 = vmatprep.mubr.f32.mxu0 0.0
    %678 = vmatmul.mubr.f32.gmra.mrb[0].mxu0 %v608
    %v679 = vpop.f32.mrb[0].mxu0
    %v680 = vadd.f32 0.0, %v679
    %v681 = vpop.f32.mrb[0].mxu0
    %682 = vmatprep.mubr.f32.mxu0 0.0
    %683 = vmatmul.mubr.f32.gmra.mrb[0].mxu0 %v611
    %v684 = vpop.f32.mrb[0].mxu0
    %v685 = vadd.f32 0.0, %v684
    %v686 = vpop.f32.mrb[0].mxu0
    %687 = vdwg.mxu0
    %v689 = vsel %vm120, %v102, 0
    %v692 = vsel %vm120, %v103, 0
    %694 = vmatprep.subr.mxu0 0.0
    %695 = vmatpush1.msra.mxu0 %v118
    %696 = vmatprep.subr.mxu0 0.0
    %697 = vmatpush1.msra.mxu0 %v119
    %698 = vmatprep.subr.mxu0 0.0
    %699 = vmatpush1.msra.mxu0 0.0
    %700 = vmatprep.subr.mxu0 0.0
    %701 = vmatpush1.msra.mxu0 0.0
    %702 = vmatprep.subr.mxu0 0.0
    %703 = vmatpush1.msra.mxu0 0.0
    %704 = vmatprep.subr.mxu0 0.0
    %705 = vmatpush1.msra.mxu0 0.0
    %706 = vmatprep.subr.mxu0 0.0
    %707 = vmatpush1.msra.mxu0 0.0
    %708 = vmatprep.subr.mxu0 0.0
    %709 = vmatpush1.msra.mxu0 0.0
    %710 = vmatprep.subr.mxu0 0.0
    %711 = vmatpush1.msra.mxu0 0.0
    %712 = vmatprep.subr.mxu0 0.0
    %713 = vmatpush1.msra.mxu0 0.0
    %714 = vmatprep.subr.mxu0 0.0
    %715 = vmatpush1.msra.mxu0 0.0
    %716 = vmatprep.subr.mxu0 0.0
    %717 = vmatpush1.msra.mxu0 0.0
    %718 = vmatprep.subr.mxu0 0.0
    %719 = vmatpush1.msra.mxu0 0.0
    %720 = vmatprep.subr.mxu0 0.0
    %721 = vmatpush1.msra.mxu0 0.0
    %722 = vmatprep.subr.mxu0 0.0
    %723 = vmatpush1.msra.mxu0 0.0
    %724 = vmatprep.subr.mxu0 0.0
    %725 = vmatpush1.msra.mxu0 0.0
    %726 = vmatprep.subr.mxu0 0.0
    %727 = vmatpush1.msra.mxu0 0.0
    %728 = vmatprep.subr.mxu0 0.0
    %729 = vmatpush1.msra.mxu0 0.0
    %730 = vmatprep.subr.mxu0 0.0
    %731 = vmatpush1.msra.mxu0 0.0
    %732 = vmatprep.subr.mxu0 0.0
    %733 = vmatpush1.msra.mxu0 0.0
    %734 = vmatprep.subr.mxu0 0.0
    %735 = vmatpush1.msra.mxu0 0.0
    %736 = vmatprep.subr.mxu0 0.0
    %737 = vmatpush1.msra.mxu0 0.0
    %738 = vmatprep.subr.mxu0 0.0
    %739 = vmatpush1.msra.mxu0 0.0
    %740 = vmatprep.subr.mxu0 0.0
    %741 = vmatpush1.msra.mxu0 0.0
    %742 = vmatprep.subr.mxu0 0.0
    %743 = vmatpush1.msra.mxu0 0.0
    %744 = vmatprep.subr.mxu0 0.0
    %745 = vmatpush1.msra.mxu0 0.0
    %746 = vmatprep.subr.mxu0 0.0
    %747 = vmatpush1.msra.mxu0 0.0
    %748 = vmatprep.subr.mxu0 0.0
    %749 = vmatpush1.msra.mxu0 0.0
    %750 = vmatprep.subr.mxu0 0.0
    %751 = vmatpush1.msra.mxu0 0.0
    %752 = vmatprep.subr.mxu0 0.0
    %753 = vmatpush1.msra.mxu0 0.0
    %754 = vmatprep.subr.mxu0 0.0
    %755 = vmatpush1.msra.mxu0 0.0
    %756 = vmatprep.subr.mxu0 0.0
    %757 = vmatpush1.msra.mxu0 0.0
    %758 = vmatprep.mubr.f32.mxu0 0.0
    %759 = vmatmul.mubr.f32.gmra.mrb[0].mxu0 %v689
    %v760 = vpop.f32.mrb[0].mxu0
    %v761 = vadd.f32 0.0, %v760
    %v762 = vpop.f32.mrb[0].mxu0
    %763 = vmatprep.mubr.f32.mxu0 0.0
    %764 = vmatmul.mubr.f32.gmra.mrb[0].mxu0 %v692
    %v765 = vpop.f32.mrb[0].mxu0
    %v766 = vadd.f32 0.0, %v765
    %v767 = vpop.f32.mrb[0].mxu0
    %768 = vdwg.mxu0
    %769 = vst.msk [vmem:[#allocation11] sm:$0xff] %vm120, %v194
    %770 = vst.msk [vmem:[#allocation11 + $0x8] sm:$0xff] %vm120, %v199
    %771 = vst.msk [vmem:[#allocation11 + $0x10] sm:$0xff] %vm120, %v275
    %772 = vst.msk [vmem:[#allocation11 + $0x18] sm:$0xff] %vm120, %v280
    %773 = vst.msk [vmem:[#allocation11 + $0x20] sm:$0xff] %vm120, %v356
    %774 = vst.msk [vmem:[#allocation11 + $0x28] sm:$0xff] %vm120, %v361
    %775 = vst.msk [vmem:[#allocation11 + $0x30] sm:$0xff] %vm120, %v437
    %776 = vst.msk [vmem:[#allocation11 + $0x38] sm:$0xff] %vm120, %v442
    %777 = vst.msk [vmem:[#allocation11 + $0x40] sm:$0xff] %vm120, %v518
    %778 = vst.msk [vmem:[#allocation11 + $0x48] sm:$0xff] %vm120, %v523
    %779 = vst.msk [vmem:[#allocation11 + $0x50] sm:$0xff] %vm120, %v599
    %780 = vst.msk [vmem:[#allocation11 + $0x58] sm:$0xff] %vm120, %v604
    %781 = vst.msk [vmem:[#allocation11 + $0x60] sm:$0xff] %vm120, %v680
    %782 = vst.msk [vmem:[#allocation11 + $0x68] sm:$0xff] %vm120, %v685
    %783 = vst.msk [vmem:[#allocation11 + $0x70] sm:$0xff] %vm120, %v761
    %784 = vst.msk [vmem:[#allocation11 + $0x78] sm:$0xff] %vm120, %v766
    // Predicated region
    $region34: #{tpu_custom_call.1} parent=1 // pred_check
      _
    $region35: #{tpu_custom_call.1} parent=1 // pred_check_branch
      %786 = sbr.rel (0) target = $region37
    $region36: #{tpu_custom_call.1} parent=1 // pred_region
      %s788 = ssub.s32 256, 256
      %789 = vsyncadd [#allocation4], %s788
      %s790 = sshll.u32 [#allocation10], 4
      %s791 = int_to_ptr.vmem [resolvable:$true] %s790
      %796 = dma.vmem_to_hbm [thread:$0]  %s791, 256, %s4, [#allocation4], 128, 128, 8
    $region37: #{tpu_custom_call.1} parent=1 // pred_fallthru
      _
    // Predicated region
    $region38: #{tpu_custom_call.1} parent=1 // pred_check
      _
    $region39: #{tpu_custom_call.1} parent=1 // pred_check_branch
      %798 = sbr.rel (0) target = $region41
    $region40: #{tpu_custom_call.1} parent=1 // pred_region
      %s800 = ssub.s32 2048, 2048
      %801 = vsyncadd [#allocation12], %s800
      %s802 = sshll.u32 [#allocation11], 4
      %s803 = int_to_ptr.vmem [resolvable:$true] %s802
      %808 = dma.vmem_to_hbm [thread:$0]  %s803, 2048, %s5, [#allocation12], 128, 128, 8
    $region41: #{tpu_custom_call.1} parent=1 // pred_fallthru
      _
    // Predicated region
    $region42: #{tpu_custom_call.1} parent=1 // pred_check
      _
    $region43: #{tpu_custom_call.1} parent=1 // pred_check_branch
      %810 = sbr.rel (0) target = $region45
    $region44: #{tpu_custom_call.1} parent=1 // pred_region
      %811 = dma.done [#allocation4], 256
    $region45: #{tpu_custom_call.1} parent=1 // pred_fallthru
      _
    // Predicated region
    $region46: #{tpu_custom_call.1} parent=1 // pred_check
      _
    $region47: #{tpu_custom_call.1} parent=1 // pred_check_branch
      %813 = sbr.rel (0) target = $region49
    $region48: #{tpu_custom_call.1} parent=1 // pred_region
      %814 = dma.done [#allocation12], 2048
    $region49: #{tpu_custom_call.1} parent=1 // pred_fallthru
      _
    %815 = vsyncpa [#allocation3], 1
    %816 = vsyncpa [#allocation6], 1
    %817 = vsyncpa [#allocation9], 1
    %818 = vsyncpa [#allocation4], 1
    %819 = vsyncpa [#allocation12], 1

</llo_original>
